<compile_context>
chip_gen: v7x
topology: tpu7x:2x2x1
jax: 0.10.0
libtpu: 0.0.40
codegen_flags: <defaults>
</compile_context>

<pallas_src>
import functools
import math

import jax
import jax.numpy as jnp
from jax import lax
from jax.experimental import pallas as pl
from jax.experimental.pallas import tpu as pltpu

_LANES = 128


def _pick_tile(n: int, preferred: int, multiple: int) -> int:
    """Largest divisor of n that is a multiple of `multiple` and <= preferred.

    Falls back to n itself (a full-extent block is always legal)."""
    cap = min(n, max(preferred, multiple))
    best = None
    t = multiple
    while t <= cap:
        if n % t == 0:
            best = t
        t += multiple
    return best if best is not None else n


def _sublane_multiple(dtype) -> int:
    itemsize = jnp.dtype(dtype).itemsize
    return max(8, (32 // (itemsize * 8)) * 8)  # f32: 8, bf16: 16, int8/fp8: 32


# ----------------------------------------------------------------------------
# Path A: lane-dense flattened layout [rows, 128] (used when D < 128, D | 128).
# ----------------------------------------------------------------------------
def _pe_flat_kernel(x_ref, dt_ref, ph_ref, sdiv_ref, o_ref, *,
                    pos_per_row: int, seq_len: int, row_tile: int):
    row0 = pl.program_id(0) * row_tile
    rt, lanes = x_ref.shape
    r = lax.broadcasted_iota(jnp.int32, (rt, lanes), 0) + row0
    # global flat position index = row * (128 // D) + lane // D ; wrap per batch
    s = (r * pos_per_row + sdiv_ref[...]) % seq_len
    pos = s.astype(jnp.float32)
    # sin(arg) for even feature dims, cos(arg)=sin(arg+pi/2) for odd ones.
    pe = jnp.sin(pos * dt_ref[...] + ph_ref[...])
    o_ref[...] = (x_ref[...].astype(jnp.float32) + pe).astype(o_ref.dtype)


def _positional_encoding_flat(x, B, S, D):
    sub = _sublane_multiple(x.dtype)
    total = B * S * D
    rows = total // _LANES
    pos_per_row = _LANES // D
    row_tile = _pick_tile(rows, preferred=2048, multiple=sub)  # ~1 MiB f32 blocks

    xf = x.reshape(rows, _LANES)

    lane = jnp.arange(_LANES, dtype=jnp.int32)
    d = lane % D
    dt = jnp.exp((d - d % 2).astype(jnp.float32)
                 * (-math.log(10000.0) / D)).reshape(1, _LANES)
    ph = ((d % 2).astype(jnp.float32) * (math.pi / 2)).reshape(1, _LANES)
    sdiv = (lane // D).astype(jnp.int32).reshape(1, _LANES)

    kernel = functools.partial(_pe_flat_kernel, pos_per_row=pos_per_row,
                               seq_len=S, row_tile=row_tile)
    const_spec = pl.BlockSpec((1, _LANES), lambda i: (0, 0))
    out = pl.pallas_call(
        kernel,
        out_shape=jax.ShapeDtypeStruct((rows, _LANES), x.dtype),
        grid_spec=pltpu.PrefetchScalarGridSpec(
            num_scalar_prefetch=0,
            grid=(rows // row_tile,),
            in_specs=[pl.BlockSpec((row_tile, _LANES), lambda i: (i, 0)),
                      const_spec, const_spec, const_spec],
            out_specs=pl.BlockSpec((row_tile, _LANES), lambda i: (i, 0)),
        ),
        compiler_params=pltpu.CompilerParams(
            dimension_semantics=("parallel",)),
    )(xf, dt, ph, sdiv)
    return out.reshape(B, S, D)


# ----------------------------------------------------------------------------
# Path B: feature axis on lanes, grid over (batch, seq tiles).
# ----------------------------------------------------------------------------
def _pe_seq_kernel(x_ref, dt_ref, ph_ref, o_ref, *, seq_tile: int):
    s0 = pl.program_id(1) * seq_tile
    pos = (lax.broadcasted_iota(jnp.int32, x_ref.shape, 1) + s0).astype(jnp.float32)
    pe = jnp.sin(pos * dt_ref[...] + ph_ref[...])
    o_ref[...] = (x_ref[...].astype(jnp.float32) + pe).astype(o_ref.dtype)


def _positional_encoding_seq(x, B, S, D):
    sub = _sublane_multiple(x.dtype)
    itemsize = jnp.dtype(x.dtype).itemsize
    preferred = max(sub, (1 << 20) // max(1, D * itemsize))  # ~1 MiB blocks
    seq_tile = _pick_tile(S, preferred=preferred, multiple=sub)

    d = jnp.arange(D, dtype=jnp.int32)
    dt = jnp.exp((d - d % 2).astype(jnp.float32)
                 * (-math.log(10000.0) / D)).reshape(1, 1, D)
    ph = ((d % 2).astype(jnp.float32) * (math.pi / 2)).reshape(1, 1, D)

    kernel = functools.partial(_pe_seq_kernel, seq_tile=seq_tile)
    const_spec = pl.BlockSpec((1, 1, D), lambda b, s: (0, 0, 0))
    return pl.pallas_call(
        kernel,
        out_shape=jax.ShapeDtypeStruct((B, S, D), x.dtype),
        grid_spec=pltpu.PrefetchScalarGridSpec(
            num_scalar_prefetch=0,
            grid=(B, S // seq_tile),
            in_specs=[pl.BlockSpec((1, seq_tile, D), lambda b, s: (b, s, 0)),
                      const_spec, const_spec],
            out_specs=pl.BlockSpec((1, seq_tile, D), lambda b, s: (b, s, 0)),
        ),
        compiler_params=pltpu.CompilerParams(
            dimension_semantics=("parallel", "parallel")),
    )(x, dt, ph)


def positional_encoding(x: jax.Array, *, dropout_p: float = 0.1) -> jax.Array:
    """Pallas equivalent of PositionalEncoding.forward (eval mode).

    x: [B, S, D] float array.
    """
    del dropout_p  # eval-mode dropout == identity
    B, S, D = x.shape
    total = B * S * D
    # Lane-dense flattened path when the feature dim is narrower than a vreg
    # row and divides it; otherwise keep D on the lane axis.
    if D < _LANES and _LANES % D == 0 and total % _LANES == 0:
        return _positional_encoding_flat(x, B, S, D)
    return _positional_encoding_seq(x, B, S, D)


def _reference(x: jax.Array) -> jax.Array:
    """Pure-JAX replica of the PyTorch module (eval mode) for verification."""
    B, S, D = x.shape
    position = jnp.arange(S, dtype=jnp.float32)[:, None]
    div_term = jnp.exp(jnp.arange(0, D, 2, dtype=jnp.float32)
                       * (-math.log(10000.0) / D))
    pe = jnp.zeros((S, D), jnp.float32)
    pe = pe.at[:, 0::2].set(jnp.sin(position * div_term))
    pe = pe.at[:, 1::2].set(jnp.cos(position * div_term))
    return (x.astype(jnp.float32) + pe[None, :, :]).astype(x.dtype)


if __name__ == "__main__":
    key = jax.random.PRNGKey(0)
    B, S, D = 2, 8, 32          # batch=2, seq=8, d_model=32
    x = jax.random.normal(key, (B, S, D), dtype=jnp.float32)

    out = positional_encoding(x, dropout_p=0.1)
    out = jax.block_until_ready(out)

    ref = _reference(x)
    assert out.shape == (B, S, D) and out.dtype == x.dtype
    assert jnp.allclose(out, ref, atol=1e-5, rtol=1e-5), (
        float(jnp.max(jnp.abs(out - ref))))

    # Also exercise the feature-on-lanes path (D multiple of 128).
    B2, S2, D2 = 2, 64, 128
    x2 = jax.random.normal(jax.random.PRNGKey(1), (B2, S2, D2), jnp.float32)
    out2 = jax.block_until_ready(positional_encoding(x2))
    assert jnp.allclose(out2, _reference(x2), atol=1e-5, rtol=1e-5)

    print("KERNEL_OK")
</pallas_src>

<mosaic_0001>
module attributes {stable_mosaic.version = 11 : i64} {
  func.func @_pe_flat_kernel(%arg0: i32, %arg1: memref<4x128xf32, #tpu.memory_space<vmem>>, %arg2: memref<1x128xf32, #tpu.memory_space<vmem>>, %arg3: memref<1x128xf32, #tpu.memory_space<vmem>>, %arg4: memref<1x128xi32, #tpu.memory_space<vmem>>, %arg5: memref<4x128xf32, #tpu.memory_space<vmem>>) attributes {dimension_semantics = [#tpu.dimension_semantics<parallel>], iteration_bounds = array<i64: 1>, scalar_prefetch = 0 : i64, scratch_operands = 0 : i64, tpu.core_type = #tpu.core_type<tc>, window_params = [{transform_indices = @transform_0, window_bounds = array<i64: 4, 128>}, {pipeline_mode = #tpu.pipeline_mode<synchronous>, transform_indices = @transform_1, window_bounds = array<i64: 1, 128>}, {pipeline_mode = #tpu.pipeline_mode<synchronous>, transform_indices = @transform_2, window_bounds = array<i64: 1, 128>}, {pipeline_mode = #tpu.pipeline_mode<synchronous>, transform_indices = @transform_3, window_bounds = array<i64: 1, 128>}, {transform_indices = @transform_4, window_bounds = array<i64: 4, 128>}]} {
    %c4_i32 = arith.constant 4 : i32
    %0 = arith.muli %arg0, %c4_i32 : i32
    %1 = tpu.iota {dimensions = array<i32: 0>} : vector<4x128xi32>
    %2 = vector.broadcast %0 : i32 to vector<4x128xi32>
    %3 = arith.addi %1, %2 : vector<4x128xi32>
    %c4_i32_0 = arith.constant 4 : i32
    %4 = vector.broadcast %c4_i32_0 : i32 to vector<4x128xi32>
    %5 = arith.muli %3, %4 : vector<4x128xi32>
    %c0 = arith.constant 0 : index
    %c0_1 = arith.constant 0 : index
    %6 = vector.load %arg4[%c0, %c0_1] : memref<1x128xi32, #tpu.memory_space<vmem>>, vector<1x128xi32>
    %7 = vector.broadcast %6 : vector<1x128xi32> to vector<4x128xi32>
    %8 = arith.addi %5, %7 : vector<4x128xi32>
    %c8_i32 = arith.constant 8 : i32
    %c0_i32 = arith.constant 0 : i32
    %9 = arith.cmpi eq, %c8_i32, %c0_i32 : i32
    %c1_i32 = arith.constant 1 : i32
    %10 = arith.select %9, %c1_i32, %c8_i32 : i32
    %11 = vector.broadcast %10 : i32 to vector<4x128xi32>
    %12 = arith.remsi %8, %11 : vector<4x128xi32>
    %c0_i32_2 = arith.constant 0 : i32
    %13 = vector.broadcast %c0_i32_2 : i32 to vector<4x128xi32>
    %14 = arith.cmpi ne, %12, %13 : vector<4x128xi32>
    %c0_i32_3 = arith.constant 0 : i32
    %15 = vector.broadcast %c0_i32_3 : i32 to vector<4x128xi32>
    %16 = arith.cmpi slt, %12, %15 : vector<4x128xi32>
    %c0_i32_4 = arith.constant 0 : i32
    %17 = arith.cmpi slt, %10, %c0_i32_4 : i32
    %18 = vector.broadcast %17 : i1 to vector<4x128xi1>
    %19 = vector.broadcast %18 : vector<4x128xi1> to vector<4x128xi1>
    %20 = arith.xori %16, %19 : vector<4x128xi1>
    %21 = arith.andi %20, %14 : vector<4x128xi1>
    %22 = vector.broadcast %10 : i32 to vector<4x128xi32>
    %23 = arith.addi %12, %22 : vector<4x128xi32>
    %24 = arith.select %21, %23, %12 : vector<4x128xi1>, vector<4x128xi32>
    %25 = arith.sitofp %24 : vector<4x128xi32> to vector<4x128xf32>
    %c0_5 = arith.constant 0 : index
    %c0_6 = arith.constant 0 : index
    %26 = vector.load %arg2[%c0_5, %c0_6] : memref<1x128xf32, #tpu.memory_space<vmem>>, vector<1x128xf32>
    %27 = vector.broadcast %26 : vector<1x128xf32> to vector<4x128xf32>
    %28 = arith.mulf %25, %27 : vector<4x128xf32>
    %c0_7 = arith.constant 0 : index
    %c0_8 = arith.constant 0 : index
    %29 = vector.load %arg3[%c0_7, %c0_8] : memref<1x128xf32, #tpu.memory_space<vmem>>, vector<1x128xf32>
    %30 = vector.broadcast %29 : vector<1x128xf32> to vector<4x128xf32>
    %31 = arith.addf %28, %30 : vector<4x128xf32>
    %32 = math.sin %31 : vector<4x128xf32>
    %c0_9 = arith.constant 0 : index
    %c0_10 = arith.constant 0 : index
    %33 = vector.load %arg1[%c0_9, %c0_10] : memref<4x128xf32, #tpu.memory_space<vmem>>, vector<4x128xf32>
    %34 = arith.addf %33, %32 : vector<4x128xf32>
    %c0_11 = arith.constant 0 : index
    %c0_12 = arith.constant 0 : index
    %35 = vector.load %arg5[%c0_11, %c0_12] : memref<4x128xf32, #tpu.memory_space<vmem>>, vector<4x128xf32>
    tpu.vector_store %arg5[%c0_11, %c0_12], %34 {strides = array<i32>} : memref<4x128xf32, #tpu.memory_space<vmem>>, vector<4x128xf32>,
    return
  }
  func.func @transform_0(%arg0: i32) -> (i32, i32) {
    %c0_i32 = arith.constant 0 : i32
    %c0_i32_0 = arith.constant 0 : i32
    return %arg0, %c0_i32 : i32, i32
  }
  func.func @transform_1(%arg0: i32) -> (i32, i32) {
    %c0_i32 = arith.constant 0 : i32
    %c0_i32_0 = arith.constant 0 : i32
    %c0_i32_1 = arith.constant 0 : i32
    return %c0_i32, %c0_i32_0 : i32, i32
  }
  func.func @transform_2(%arg0: i32) -> (i32, i32) {
    %c0_i32 = arith.constant 0 : i32
    %c0_i32_0 = arith.constant 0 : i32
    %c0_i32_1 = arith.constant 0 : i32
    return %c0_i32, %c0_i32_0 : i32, i32
  }
  func.func @transform_3(%arg0: i32) -> (i32, i32) {
    %c0_i32 = arith.constant 0 : i32
    %c0_i32_0 = arith.constant 0 : i32
    %c0_i32_1 = arith.constant 0 : i32
    return %c0_i32, %c0_i32_0 : i32, i32
  }
  func.func @transform_4(%arg0: i32) -> (i32, i32) {
    %c0_i32 = arith.constant 0 : i32
    %c0_i32_0 = arith.constant 0 : i32
    return %arg0, %c0_i32 : i32, i32
  }
}

</mosaic_0001>

<llo_original>
// kernel: tpu_custom_call.1
$region0: #{tpu_custom_call.1}
  #allocation0 [shape = 'u32[]', space=smem, size = 0x4, offset = 0x4, fixed_abs, tag = 'smem constant byte address 0x4 - core index']
  #allocation1 [shape = 'u32[144,128]{1,0:T(1,128)}', space=vmem, size = 0x12000, scoped, tag = 'internal scratch']
  %s0 = inlined_call_operand.hbm [shape: f32[4,128], index: 0, kind: input, shape index: {}]
  %s1 = inlined_call_operand.vmem [shape: f32[1,128], index: 1, kind: input, shape index: {}]
  %s2 = inlined_call_operand.vmem [shape: f32[1,128], index: 2, kind: input, shape index: {}]
  %s3 = inlined_call_operand.vmem [shape: s32[1,128], index: 3, kind: input, shape index: {}]
  %s4 = inlined_call_operand.hbm [shape: f32[4,128], index: 4, kind: output, shape index: {}]
  %s5 = sld [smem:[#allocation0]]
  $region30: #{tpu_custom_call.1} parent=0
    _
  %s7 = ssub.s32 1, %s5
  %s8 = scalar_select 0, %s7, %s5
  $region1: #{tpu_custom_call.1} parent=0
    #allocation2 [shape = 'u8[2048]{0}', space=vmem, size = 0x800, scoped, tag = 'input window, operand 0, single buffered']
    #allocation3 [shape = 's32[1]{0}', space=sflag, size = 0x4, scoped, tag = 'scoped memory for tpu_custom_call.1']
    #allocation4 [shape = 's32[1]{0}', space=sflag, size = 0x4, scoped, tag = 'scoped memory for tpu_custom_call.1']
    #allocation5 [shape = 'u8[2048]{0}', space=vmem, size = 0x800, scoped, tag = 'output window, operand 0, single buffered']
    %9 = vsyncpa [#allocation3], 0
    %10 = vsyncpa [#allocation4], 0
    // Predicated region
    $region2: #{tpu_custom_call.1} parent=1 // pred_check
      _
    $region3: #{tpu_custom_call.1} parent=1 // pred_check_branch
      %12 = sbr.rel (0) target = $region5
    $region4: #{tpu_custom_call.1} parent=1 // pred_region
      %s14 = ssub.s32 64, 64
      %15 = vsyncadd [#allocation3], %s14
      %s17 = sshll.u32 [#allocation2], 4
      %s18 = int_to_ptr.vmem [resolvable:$true] %s17
      %20 = dma.hbm_to_vmem [thread:$0]  %s0, 64, %s18, [#allocation3]
    $region5: #{tpu_custom_call.1} parent=1 // pred_fallthru
      _
    // Predicated region
    $region6: #{tpu_custom_call.1} parent=1 // pred_check
      _
    $region7: #{tpu_custom_call.1} parent=1 // pred_check_branch
      %22 = sbr.rel (0) target = $region9
    $region8: #{tpu_custom_call.1} parent=1 // pred_region
      _
    $region9: #{tpu_custom_call.1} parent=1 // pred_fallthru
      _
    // Predicated region
    $region10: #{tpu_custom_call.1} parent=1 // pred_check
      _
    $region11: #{tpu_custom_call.1} parent=1 // pred_check_branch
      %24 = sbr.rel (0) target = $region13
    $region12: #{tpu_custom_call.1} parent=1 // pred_region
      _
    $region13: #{tpu_custom_call.1} parent=1 // pred_fallthru
      _
    // Predicated region
    $region14: #{tpu_custom_call.1} parent=1 // pred_check
      _
    $region15: #{tpu_custom_call.1} parent=1 // pred_check_branch
      %26 = sbr.rel (0) target = $region17
    $region16: #{tpu_custom_call.1} parent=1 // pred_region
      _
    $region17: #{tpu_custom_call.1} parent=1 // pred_fallthru
      _
    // Predicated region
    $region18: #{tpu_custom_call.1} parent=1 // pred_check
      _
    $region19: #{tpu_custom_call.1} parent=1 // pred_check_branch
      %28 = sbr.rel (0) target = $region21
    $region20: #{tpu_custom_call.1} parent=1 // pred_region
      %29 = dma.done [#allocation3], 64
    $region21: #{tpu_custom_call.1} parent=1 // pred_fallthru
      _
    %s30 = smul.u32 0, 4
    %v31 = vlaneseq
    %v32 = vshrl.u32 %v31, 7
    %v33 = vstv %s30
    %v34 = vadd.s32 %v32, %v33
    %v35 = vmul.u32 %v34, 4
    %v36 = vld [vmem:[%s3] sm:$0x1]
    %v37 = vlaneseq
    %v38 = vshrl.u32 %v37, 7
    %v39 = vsub.s32 0, %v38
    %v40 = vrot.slane %v36, %v39
    %v41 = vadd.s32 %v35, %v40
    %vm42 = vcmp.lt.s32.totalorder %v41, 0
    %v43 = vsub.s32 0, %v41
    %v44 = vsel %vm42, %v43, %v41
    %v45 = vshrl.u32 %v44, 3
    %v46 = vand.u32 %v44, 7
    %v47 = vsub.s32 0, %v46
    %v48 = vsel %vm42, %v47, %v46
    %vm49 = vcmp.ne.s32.totalorder %v48, 0
    %vm50 = vcmp.lt.s32.totalorder %v48, 0
    %vm51 = vmand %vm50, %vm49
    %v52 = vadd.s32 %v48, 8
    %v53 = vsel %vm51, %v52, %v48
    %v54 = vcvt.s32.f32 %v53
    %v55 = vld [vmem:[%s1] sm:$0x1]
    %v57 = vlaneseq
    %v58 = vshrl.u32 %v57, 7
    %v59 = vsub.s32 0, %v58
    %v60 = vrot.slane %v55, %v59
    %v62 = vmul.f32 %v54, %v60
    %v63 = vld [vmem:[%s2] sm:$0x1]
    %v65 = vlaneseq
    %v66 = vshrl.u32 %v65, 7
    %v67 = vsub.s32 0, %v66
    %v68 = vrot.slane %v63, %v67
    %v70 = vadd.f32 %v62, %v68
    %v71 = vand.u32 2147483647, %v70
    %vm72 = vcmp.le.f32.partialorder %v71, 0.7853982
    %vm73 = vcmp.lt.s32.totalorder %v70, 0
    %v74 = vand.u32 %v70, 2139095040
    %v75 = vshrl.u32 %v74, 23
    %v76 = vsub.s32 %v75, 127
    %v77 = vand.u32 2147483647, %v70
    %v78 = vand.u32 %v77, 8388607
    %v79 = vor.u32 %v78, 8388608
    %v80 = vsub.s32 0, %v79
    %v81 = vadd.s32 %v76, 1
    %vm82 = vcmp.gt.s32.totalorder %v81, 0
    %v83 = vsel %vm82, %v81, 0
    %v84 = vshrl.u32 %v83, 5
    %v85 = vand.u32 %v83, 31
    %v86 = vsub.s32 32, %v85
    %v87 = vshrl.u32 683565275, %v86
    %v88 = vshll.u32 683565275, %v85
    %v89 = vshrl.u32 2475754826, %v86
    %v90 = vor.u32 %v88, %v89
    %v91 = vshll.u32 2475754826, %v85
    %v92 = vshrl.u32 2131351028, %v86
    %v93 = vor.u32 %v91, %v92
    %v94 = vshll.u32 2131351028, %v85
    %v95 = vshrl.u32 2102212464, %v86
    %v96 = vor.u32 %v94, %v95
    %v97 = vshll.u32 2102212464, %v85
    %v98 = vshrl.u32 920167782, %v86
    %v99 = vor.u32 %v97, %v98
    %v100 = vshll.u32 920167782, %v85
    %v101 = vshrl.u32 1326507024, %v86
    %v102 = vor.u32 %v100, %v101
    %vm103 = vcmp.lt.s32.totalorder %v84, 1
    %vm104 = vcmp.lt.s32.totalorder %v84, 2
    %vm105 = vcmp.lt.s32.totalorder %v84, 3
    %vm106 = vcmp.lt.s32.totalorder %v84, 4
    %v107 = vsel %vm103, %v87, %v90
    %v108 = vsel %vm106, %v96, 2102212464
    %v109 = vsel %vm105, %v93, %v108
    %v110 = vsel %vm104, %v107, %v109
    %v111 = vsel %vm103, %v90, %v93
    %v112 = vsel %vm106, %v99, 920167782
    %v113 = vsel %vm105, %v96, %v112
    %v114 = vsel %vm104, %v111, %v113
    %v115 = vsel %vm103, %v93, %v96
    %v116 = vsel %vm106, %v102, 1326507024
    %v117 = vsel %vm105, %v99, %v116
    %v118 = vsel %vm104, %v115, %v117
    %v119 = vshll.u32 %v79, 8
    %v120 = vmul.u32.u64.compose %v119, %v118
    %v121 = vextract.low.u32 %v120
    %v122 = vextract.high.u32 %v120
    %v123 = vmul.u32.u64.compose %v119, %v114
    %v124 = vextract.low.u32 %v123
    %v125 = vextract.high.u32 %v123
    %v126 = vmul.u32 %v119, %v110
    %v127 = vadd.s32 %v122, %v124
    %vm128 = vc.u32 %v122, %v124
    %v129 = vadd.s32 %v125, 1
    %v130 = vsel %vm128, %v129, %v125
    %v131 = vadd.s32 %v126, %v130
    %v132 = vadd.s32 %v131, 536870912
    %v133 = vshrl.u32 %v132, 30
    %v134 = vshll.u32 %v133, 30
    %v135 = vsub.s32 %v131, %v134
    %vm136 = vcmp.lt.s32.totalorder %v135, 0
    %v137 = vsub.s32 0, %v135
    %v138 = vsel %vm136, %v137, %v135
    %v139 = vclz %v138
    %v140 = vsub.s32 %v139, 2
    %vm141 = vcmp.gt.s32.totalorder 0, %v140
    %v142 = vsel %vm141, 0, %v140
    %v143 = vsub.s32 32, %v142
    %v144 = vshll.u32 %v135, %v142
    %v145 = vshrl.u32 %v127, %v143
    %v146 = vor.u32 %v144, %v145
    %v147 = vsub.s32 4294967266, %v142
    %v148 = vadd.s32 %v147, 127
    %v149 = vshll.u32 %v148, 23
    %v150 = vor.u32 4788187, %v149
    %v151 = vand.u32 2147483647, %v150
    %v153 = vcvt.s32.f32 %v146
    %v154 = vmul.f32 %v153, %v151
    %v155 = vxor.u32 %v154, 2147483648
    %v156 = vsel %vm73, %v155, %v154
    %v157 = vsub.s32 4, %v133
    %v158 = vsel %vm73, %v157, %v133
    %v159 = vsel %vm72, %v70, %v156
    %v160 = vsel %vm72, 0, %v158
    %v161 = vcosq.f32.pop %v159
    %v162 = vsinq.f32.pop %v159
    %vm163 = vweird.f32 %v70
    %v164 = vadd.s32 %v160, 3
    %v165 = vand.u32 %v164, 3
    %vm166 = vcmp.lt.s32.totalorder %v165, 2
    %vm167 = vcmp.eq.s32.totalorder %v165, 0
    %v168 = vxor.u32 %v162, 2147483648
    %v169 = vsel %vm167, %v161, %v168
    %vm170 = vcmp.eq.s32.totalorder %v165, 2
    %v171 = vxor.u32 %v161, 2147483648
    %v172 = vsel %vm170, %v171, %v162
    %v173 = vsel %vm166, %v169, %v172
    %v174 = vsel %vm163, nan, %v173
    %v175 = vld [vmem:[#allocation2] sm:$0xf]
    %v176 = vadd.f32 %v175, %v174
    %177 = vst [vmem:[#allocation5] sm:$0xf] %v176
    // Predicated region
    $region22: #{tpu_custom_call.1} parent=1 // pred_check
      _
    $region23: #{tpu_custom_call.1} parent=1 // pred_check_branch
      %179 = sbr.rel (0) target = $region25
    $region24: #{tpu_custom_call.1} parent=1 // pred_region
      %s181 = ssub.s32 64, 64
      %182 = vsyncadd [#allocation4], %s181
      %s184 = sshll.u32 [#allocation5], 4
      %s185 = int_to_ptr.vmem [resolvable:$true] %s184
      %187 = dma.vmem_to_hbm [thread:$0]  %s185, 64, %s4, [#allocation4]
    $region25: #{tpu_custom_call.1} parent=1 // pred_fallthru
      _
    // Predicated region
    $region26: #{tpu_custom_call.1} parent=1 // pred_check
      _
    $region27: #{tpu_custom_call.1} parent=1 // pred_check_branch
      %189 = sbr.rel (0) target = $region29
    $region28: #{tpu_custom_call.1} parent=1 // pred_region
      %190 = dma.done [#allocation4], 64
    $region29: #{tpu_custom_call.1} parent=1 // pred_fallthru
      _
    %191 = vsyncpa [#allocation3], 1
    %192 = vsyncpa [#allocation4], 1

</llo_original>
